<compile_context>
chip_gen: v7x
topology: tpu7x:2x2x1
jax: 0.10.0
libtpu: 0.0.40
codegen_flags: <defaults>
</compile_context>

<pallas_src>
import jax
import jax.numpy as jnp
from jax.experimental import pallas as pl
from jax.experimental.pallas import tpu as pltpu


_VMEM_TILE_BUDGET_BYTES = 44 * 1024 * 1024   # tile budget (v7x-safe)
_VMEM_LIMIT_BYTES = 56 * 1024 * 1024         # scoped VMEM limit passed to Mosaic


def _round_up(x, m):
    return (x + m - 1) // m * m


def _pad_to(a, shape):
    pads = [(0, s - d) for d, s in zip(a.shape, shape)]
    if any(p[1] for p in pads):
        a = jnp.pad(a, pads)
    return a


# ---------------------------------------------------------------------------
# Kernels
# ---------------------------------------------------------------------------

def _single_pass_kernel(x_ref, w_ref, b_ref, o_ref):
    # Full K in a single step: no accumulator, no init/finalize branches.
    o_ref[...] = (
        jnp.dot(x_ref[...], w_ref[...], preferred_element_type=jnp.float32)
        + b_ref[...]
    ).astype(o_ref.dtype)


def _acc_kernel(x_ref, w_ref, b_ref, o_ref, acc_ref):
    # K-tiled fallback (hidden dim too large for a single VMEM-resident slab).
    k = pl.program_id(2)

    @pl.when(k == 0)
    def _():
        acc_ref[...] = jnp.zeros_like(acc_ref)

    acc_ref[...] += jnp.dot(
        x_ref[...], w_ref[...], preferred_element_type=jnp.float32
    )

    @pl.when(k == pl.num_programs(2) - 1)
    def _():
        o_ref[...] = (acc_ref[...] + b_ref[...]).astype(o_ref.dtype)


# ---------------------------------------------------------------------------
# Tiling + dispatch
# ---------------------------------------------------------------------------

def _choose_tiles(H, V, out_bytes=4, tm_budget=256,
                  budget=_VMEM_TILE_BUDGET_BYTES):
    """Pick (tn, tk) so double-buffered tiles fit the VMEM budget."""
    tn = min(_round_up(V, 128), 512)          # lane-dense, MXU-friendly
    tk = _round_up(H, 128)                    # try to collapse K entirely

    def vmem_bytes(tk_, tn_):
        return (2 * tm_budget * tk_ * 2       # X bf16, double-buffered
                + 2 * tk_ * tn_ * 2           # W bf16, double-buffered
                + 2 * 1 * tn_ * 4             # bias f32, double-buffered
                + 2 * tm_budget * tn_ * out_bytes  # output, double-buffered
                + tm_budget * tn_ * 4)        # f32 accumulator (worst case)

    while vmem_bytes(tk, tn) > budget and tk > 512:
        tk = _round_up(tk // 2, 128)
    while vmem_bytes(tk, tn) > budget and tn > 128:
        tn = _round_up(tn // 2, 128)
    return tn, tk


def _output_embedding_matmul(x2d, w_t, bias, out_dtype, *, tm, tn, tk):
    """x2d: (Mp, Hp) bf16, w_t: (Hp, Vp) bf16, bias: (1, Vp) f32 -> (Mp, Vp)."""
    mp, hp = x2d.shape
    _, vp = w_t.shape
    nm, nn, nk = mp // tm, vp // tn, hp // tk

    cost = pl.CostEstimate(
        flops=2 * mp * hp * vp,
        transcendentals=0,
        bytes_accessed=(x2d.size * x2d.dtype.itemsize
                        + w_t.size * w_t.dtype.itemsize
                        + bias.size * bias.dtype.itemsize
                        + mp * vp * jnp.dtype(out_dtype).itemsize),
    )
    out_shape = jax.ShapeDtypeStruct((mp, vp), out_dtype)

    if nk == 1:
        # Single-shot over K.  Grid order (N outer, M inner): the W slab's block
        # index depends only on j, so it is fetched from HBM exactly once.
        grid_spec = pltpu.PrefetchScalarGridSpec(
            num_scalar_prefetch=0,
            grid=(nn, nm),
            in_specs=[
                pl.BlockSpec((tm, tk), lambda j, i: (i, 0)),   # X tile
                pl.BlockSpec((tk, tn), lambda j, i: (0, j)),   # W column slab
                pl.BlockSpec((1, tn), lambda j, i: (0, j)),    # bias
            ],
            out_specs=pl.BlockSpec((tm, tn), lambda j, i: (i, j)),
        )
        kernel = _single_pass_kernel
        dims = ("parallel", "parallel")
    else:
        grid_spec = pltpu.PrefetchScalarGridSpec(
            num_scalar_prefetch=0,
            grid=(nn, nm, nk),                 # K innermost (reduction)
            in_specs=[
                pl.BlockSpec((tm, tk), lambda j, i, k: (i, k)),
                pl.BlockSpec((tk, tn), lambda j, i, k: (k, j)),
                pl.BlockSpec((1, tn), lambda j, i, k: (0, j)),
            ],
            out_specs=pl.BlockSpec((tm, tn), lambda j, i, k: (i, j)),
            scratch_shapes=[pltpu.VMEM((tm, tn), jnp.float32)],
        )
        kernel = _acc_kernel
        dims = ("parallel", "parallel", "arbitrary")

    return pl.pallas_call(
        kernel,
        out_shape=out_shape,
        grid_spec=grid_spec,
        compiler_params=pltpu.CompilerParams(
            dimension_semantics=dims,
            vmem_limit_bytes=_VMEM_LIMIT_BYTES,
        ),
        cost_estimate=cost,
    )(x2d, w_t, bias)


# ---------------------------------------------------------------------------
# Module wrapper
# ---------------------------------------------------------------------------

class OutputEmbeddingPallas:
    """JAX/Pallas equivalent of the PyTorch OutputEmbedding module."""

    def __init__(self, w_orig, b_orig, n_new_tokens, initialize_tokens=None):
        w_orig = jnp.asarray(w_orig)
        b_orig = jnp.asarray(b_orig)
        self.n_new_tokens = n_new_tokens
        self.hidden = w_orig.shape[1]

        if n_new_tokens > 0:
            if initialize_tokens is not None:
                w_new = jnp.take(w_orig, jnp.asarray(initialize_tokens), axis=0)
            else:
                w_new = jnp.tile(
                    jnp.mean(w_orig, axis=0, keepdims=True), (n_new_tokens, 1)
                )
            # TODO(synk): torch.nn.Linear initializes the new bias randomly;
            # we use zeros for determinism.
            b_new = jnp.zeros((n_new_tokens,), dtype=b_orig.dtype)
            w_all = jnp.concatenate([w_orig, w_new], axis=0)    # (V_total, H)
            b_all = jnp.concatenate([b_orig, b_new], axis=0)    # (V_total,)
        else:
            w_all, b_all = w_orig, b_orig
        self.v_total = w_all.shape[0]

        # Tile selection, budgeted for the smallest per-core VMEM (v7x, 64 MiB).
        self.tn, self.tk = _choose_tiles(self.hidden, self.v_total, out_bytes=4)
        self.hp = _round_up(self.hidden, self.tk)
        self.vp = _round_up(self.v_total, self.tn)

        # Combined, transposed, bf16, padded weight: (Hp, Vp).
        w_t = jnp.transpose(w_all).astype(jnp.bfloat16)
        self.w_t = _pad_to(w_t, (self.hp, self.vp))
        # Bias stays f32 for the f32 bias-add in the kernel.
        self.bias = _pad_to(b_all.astype(jnp.float32), (self.vp,))[None, :]

    def __call__(self, inputs):
        *lead, H = inputs.shape
        assert H == self.hidden, (H, self.hidden)
        M = 1
        for d in lead:
            M *= d
        tm = min(256, _round_up(max(M, 1), 8))   # tm = M (rounded) when M small
        mp = _round_up(M, tm)

        x2d = inputs.reshape(M, H)
        x2d = _pad_to(x2d, (mp, self.hp)).astype(jnp.bfloat16)

        out2d = _output_embedding_matmul(
            x2d, self.w_t, self.bias, jnp.dtype(inputs.dtype),
            tm=tm, tn=self.tn, tk=self.tk,
        )
        out = out2d[:M, :self.v_total]
        return out.reshape(*lead, self.v_total)


# ---------------------------------------------------------------------------
# Reference + self-test
# ---------------------------------------------------------------------------

def _reference(inputs, w_orig, b_orig, n_new):
    # Mirrors the kernel numerics: bf16-rounded X / W, f32 accumulate + f32 bias.
    if n_new > 0:
        w_new = jnp.tile(jnp.mean(w_orig, axis=0, keepdims=True), (n_new, 1))
        b_new = jnp.zeros((n_new,), dtype=b_orig.dtype)
        w_all = jnp.concatenate([w_orig, w_new], axis=0)
        b_all = jnp.concatenate([b_orig, b_new], axis=0)
    else:
        w_all, b_all = w_orig, b_orig
    xb = inputs.astype(jnp.bfloat16).astype(jnp.float32)
    wb = w_all.astype(jnp.bfloat16).astype(jnp.float32)
    return jnp.einsum("bsh,vh->bsv", xb, wb,
                      precision=jax.lax.Precision.HIGHEST) + b_all


if __name__ == "__main__":
    batch, seq, hidden = 2, 8, 128
    vocab, n_new_tokens = 256, 128

    key = jax.random.PRNGKey(0)
    k_x, k_w, k_b = jax.random.split(key, 3)
    x = jax.random.normal(k_x, (batch, seq, hidden), dtype=jnp.float32)
    w_orig = jax.random.normal(k_w, (vocab, hidden), dtype=jnp.float32) * 0.02
    b_orig = jax.random.normal(k_b, (vocab,), dtype=jnp.float32) * 0.01

    module = OutputEmbeddingPallas(w_orig, b_orig, n_new_tokens)
    out = jax.block_until_ready(module(x))

    ref = _reference(x, w_orig, b_orig, n_new_tokens)
    assert out.shape == (batch, seq, vocab + n_new_tokens), out.shape
    max_err = float(jnp.max(jnp.abs(out - ref)))
    assert jnp.allclose(out, ref, atol=2e-3, rtol=2e-3), max_err

    print("KERNEL_OK")
</pallas_src>

<mosaic_0001>
module attributes {stable_mosaic.version = 11 : i64} {
  func.func @_single_pass_kernel(%arg0: i32, %arg1: i32, %arg2: memref<16x128xbf16, #tpu.memory_space<vmem>>, %arg3: memref<128x384xbf16, #tpu.memory_space<vmem>>, %arg4: memref<1x384xf32, #tpu.memory_space<vmem>>, %arg5: memref<16x384xf32, #tpu.memory_space<vmem>>) attributes {dimension_semantics = [#tpu.dimension_semantics<parallel>, #tpu.dimension_semantics<parallel>], iteration_bounds = array<i64: 1, 1>, scalar_prefetch = 0 : i64, scratch_operands = 0 : i64, tpu.core_type = #tpu.core_type<tc>, window_params = [{transform_indices = @transform_0, window_bounds = array<i64: 16, 128>}, {transform_indices = @transform_1, window_bounds = array<i64: 128, 384>}, {transform_indices = @transform_2, window_bounds = array<i64: 1, 384>}, {transform_indices = @transform_3, window_bounds = array<i64: 16, 384>}]} {
    %c0 = arith.constant 0 : index
    %c0_0 = arith.constant 0 : index
    %0 = vector.load %arg2[%c0, %c0_0] : memref<16x128xbf16, #tpu.memory_space<vmem>>, vector<16x128xbf16>
    %c0_1 = arith.constant 0 : index
    %c0_2 = arith.constant 0 : index
    %1 = vector.load %arg3[%c0_1, %c0_2] : memref<128x384xbf16, #tpu.memory_space<vmem>>, vector<128x384xbf16>
    %cst = arith.constant dense<0.000000e+00> : vector<16x384xf32>
    %2 = tpu.matmul %0, %1, %cst {dimension_numbers = #tpu.dot_dimension_numbers<[1], [0], [0], [1], [0, 0, 1, 1], [], []>} : vector<16x128xbf16>, vector<128x384xbf16>, vector<16x384xf32> -> vector<16x384xf32>
    %c0_3 = arith.constant 0 : index
    %c0_4 = arith.constant 0 : index
    %3 = vector.load %arg4[%c0_3, %c0_4] : memref<1x384xf32, #tpu.memory_space<vmem>>, vector<1x384xf32>
    %4 = vector.broadcast %3 : vector<1x384xf32> to vector<16x384xf32>
    %5 = arith.addf %2, %4 : vector<16x384xf32>
    %c0_5 = arith.constant 0 : index
    %c0_6 = arith.constant 0 : index
    %6 = vector.load %arg5[%c0_5, %c0_6] : memref<16x384xf32, #tpu.memory_space<vmem>>, vector<16x384xf32>
    tpu.vector_store %arg5[%c0_5, %c0_6], %5 {strides = array<i32>} : memref<16x384xf32, #tpu.memory_space<vmem>>, vector<16x384xf32>,
    return
  }
  func.func @transform_0(%arg0: i32, %arg1: i32) -> (i32, i32) {
    %c0_i32 = arith.constant 0 : i32
    %c0_i32_0 = arith.constant 0 : i32
    return %arg1, %c0_i32 : i32, i32
  }
  func.func @transform_1(%arg0: i32, %arg1: i32) -> (i32, i32) {
    %c0_i32 = arith.constant 0 : i32
    %c0_i32_0 = arith.constant 0 : i32
    return %c0_i32, %arg0 : i32, i32
  }
  func.func @transform_2(%arg0: i32, %arg1: i32) -> (i32, i32) {
    %c0_i32 = arith.constant 0 : i32
    %c0_i32_0 = arith.constant 0 : i32
    return %c0_i32, %arg0 : i32, i32
  }
  func.func @transform_3(%arg0: i32, %arg1: i32) -> (i32, i32) {
    %c0_i32 = arith.constant 0 : i32
    return %arg1, %arg0 : i32, i32
  }
}

</mosaic_0001>

<llo_original>
// kernel: tpu_custom_call.1
$region0: #{tpu_custom_call.1}
  #allocation0 [shape = 'u32[]', space=smem, size = 0x4, offset = 0x4, fixed_abs, tag = 'smem constant byte address 0x4 - core index']
  #allocation1 [shape = 'u32[144,128]{1,0:T(1,128)}', space=vmem, size = 0x12000, scoped, tag = 'internal scratch']
  %s0 = inlined_call_operand.hbm [shape: bf16[16,128], index: 0, kind: input, shape index: {}]
  %s1 = inlined_call_operand.hbm [shape: bf16[128,384], index: 1, kind: input, shape index: {}]
  %s2 = inlined_call_operand.vmem [shape: f32[1,384], index: 2, kind: input, shape index: {}]
  %s3 = inlined_call_operand.hbm [shape: f32[16,384], index: 3, kind: output, shape index: {}]
  %s4 = sld [smem:[#allocation0]]
  $region30: #{tpu_custom_call.1} parent=0
    _
  %s6 = ssub.s32 1, %s4
  %s7 = scalar_select 0, %s6, %s4
  $region1: #{tpu_custom_call.1} parent=0
    #allocation2 [shape = 'u8[4096]{0}', space=vmem, size = 0x1000, scoped, tag = 'input window, operand 0, single buffered']
    #allocation3 [shape = 's32[1]{0}', space=sflag, size = 0x4, scoped, tag = 'scoped memory for tpu_custom_call.1']
    #allocation4 [shape = 's32[1]{0}', space=sflag, size = 0x4, scoped, tag = 'scoped memory for tpu_custom_call.1']
    #allocation5 [shape = 'u8[98304]{0}', space=vmem, size = 0x18000, scoped, tag = 'input window, operand 1, single buffered']
    #allocation6 [shape = 's32[1]{0}', space=sflag, size = 0x4, scoped, tag = 'scoped memory for tpu_custom_call.1']
    #allocation7 [shape = 'u8[24576]{0}', space=vmem, size = 0x6000, scoped, tag = 'output window, operand 0, single buffered']
    %8 = vsyncpa [#allocation3], 0
    %9 = vsyncpa [#allocation6], 0
    %10 = vsyncpa [#allocation4], 0
    // Predicated region
    $region2: #{tpu_custom_call.1} parent=1 // pred_check
      _
    $region3: #{tpu_custom_call.1} parent=1 // pred_check_branch
      %12 = sbr.rel (0) target = $region5
    $region4: #{tpu_custom_call.1} parent=1 // pred_region
      %s14 = ssub.s32 128, 128
      %15 = vsyncadd [#allocation3], %s14
      %s16 = sshll.u32 [#allocation2], 4
      %s17 = int_to_ptr.vmem [resolvable:$true] %s16
      %22 = dma.hbm_to_vmem [thread:$0]  %s0, 128, %s17, [#allocation3], 64, 64, 4
    $region5: #{tpu_custom_call.1} parent=1 // pred_fallthru
      _
    // Predicated region
    $region6: #{tpu_custom_call.1} parent=1 // pred_check
      _
    $region7: #{tpu_custom_call.1} parent=1 // pred_check_branch
      %24 = sbr.rel (0) target = $region9
    $region8: #{tpu_custom_call.1} parent=1 // pred_region
      %s26 = ssub.s32 3072, 3072
      %27 = vsyncadd [#allocation6], %s26
      %s28 = sshll.u32 [#allocation5], 4
      %s29 = int_to_ptr.vmem [resolvable:$true] %s28
      %34 = dma.hbm_to_vmem [thread:$0]  %s1, 3072, %s29, [#allocation6], 192, 192, 12
    $region9: #{tpu_custom_call.1} parent=1 // pred_fallthru
      _
    // Predicated region
    $region10: #{tpu_custom_call.1} parent=1 // pred_check
      _
    $region11: #{tpu_custom_call.1} parent=1 // pred_check_branch
      %36 = sbr.rel (0) target = $region13
    $region12: #{tpu_custom_call.1} parent=1 // pred_region
      _
    $region13: #{tpu_custom_call.1} parent=1 // pred_fallthru
      _
    // Predicated region
    $region14: #{tpu_custom_call.1} parent=1 // pred_check
      _
    $region15: #{tpu_custom_call.1} parent=1 // pred_check_branch
      %38 = sbr.rel (0) target = $region17
    $region16: #{tpu_custom_call.1} parent=1 // pred_region
      %39 = dma.done [#allocation3], 128
    $region17: #{tpu_custom_call.1} parent=1 // pred_fallthru
      _
    // Predicated region
    $region18: #{tpu_custom_call.1} parent=1 // pred_check
      _
    $region19: #{tpu_custom_call.1} parent=1 // pred_check_branch
      %41 = sbr.rel (0) target = $region21
    $region20: #{tpu_custom_call.1} parent=1 // pred_region
      %42 = dma.done [#allocation6], 3072
    $region21: #{tpu_custom_call.1} parent=1 // pred_fallthru
      _
    %v44 = vld [vmem:[#allocation2] sm:$0xf]
    %v45 = vld [vmem:[#allocation2 + $0x4] sm:$0xf]
    %v46 = vld [vmem:[#allocation5] sm:$0xff]
    %v47 = vld [vmem:[#allocation5 + $0x8] sm:$0xf]
    %v48 = vld [vmem:[#allocation5 + $0xc] sm:$0xff]
    %v49 = vld [vmem:[#allocation5 + $0x14] sm:$0xf]
    %v50 = vld [vmem:[#allocation5 + $0x18] sm:$0xff]
    %v51 = vld [vmem:[#allocation5 + $0x20] sm:$0xf]
    %v52 = vld [vmem:[#allocation5 + $0x24] sm:$0xff]
    %v53 = vld [vmem:[#allocation5 + $0x2c] sm:$0xf]
    %v54 = vld [vmem:[#allocation5 + $0x30] sm:$0xff]
    %v55 = vld [vmem:[#allocation5 + $0x38] sm:$0xf]
    %v56 = vld [vmem:[#allocation5 + $0x3c] sm:$0xff]
    %v57 = vld [vmem:[#allocation5 + $0x44] sm:$0xf]
    %v58 = vld [vmem:[#allocation5 + $0x48] sm:$0xff]
    %v59 = vld [vmem:[#allocation5 + $0x50] sm:$0xf]
    %v60 = vld [vmem:[#allocation5 + $0x54] sm:$0xff]
    %v61 = vld [vmem:[#allocation5 + $0x5c] sm:$0xf]
    %v62 = vld [vmem:[#allocation5 + $0x60] sm:$0xff]
    %v63 = vld [vmem:[#allocation5 + $0x68] sm:$0xf]
    %v64 = vld [vmem:[#allocation5 + $0x6c] sm:$0xff]
    %v65 = vld [vmem:[#allocation5 + $0x74] sm:$0xf]
    %v66 = vld [vmem:[#allocation5 + $0x78] sm:$0xff]
    %v67 = vld [vmem:[#allocation5 + $0x80] sm:$0xf]
    %v68 = vld [vmem:[#allocation5 + $0x84] sm:$0xff]
    %v69 = vld [vmem:[#allocation5 + $0x8c] sm:$0xf]
    %v70 = vld [vmem:[#allocation5 + $0x90] sm:$0xff]
    %v71 = vld [vmem:[#allocation5 + $0x98] sm:$0xf]
    %v72 = vld [vmem:[#allocation5 + $0x9c] sm:$0xff]
    %v73 = vld [vmem:[#allocation5 + $0xa4] sm:$0xf]
    %v74 = vld [vmem:[#allocation5 + $0xa8] sm:$0xff]
    %v75 = vld [vmem:[#allocation5 + $0xb0] sm:$0xf]
    %v76 = vld [vmem:[#allocation5 + $0xb4] sm:$0xff]
    %v77 = vld [vmem:[#allocation5 + $0xbc] sm:$0xf]
    %v78 = vld [vmem:[%s2] sm:$0x7]
    %v80 = vlaneseq
    %v81 = vshrl.u32 %v80, 7
    %v82 = vsub.s32 0, %v81
    %v83 = vrot.slane %v78, %v82
    %v84 = vlaneseq
    %v85 = vshrl.u32 %v84, 7
    %v86 = vsub.s32 1, %v85
    %v87 = vrot.slane %v78, %v86
    %v88 = vlaneseq
    %v89 = vshrl.u32 %v88, 7
    %v90 = vsub.s32 2, %v89
    %v91 = vrot.slane %v78, %v90
    %v97 = vunpack.c.l.b16 %v44
    %v98 = vunpack.c.l.b16 %v45
    %v99 = vpack.c.b16 %v98, %v97
    %v133 = vunpack.c.l.b16 %v46
    %v134 = vunpack.c.h.b16 %v46
    %v135 = vunpack.c.l.b16 %v47
    %v136 = vunpack.c.l.b16 %v48
    %v137 = vunpack.c.h.b16 %v48
    %v138 = vunpack.c.l.b16 %v49
    %v139 = vunpack.c.l.b16 %v50
    %v140 = vunpack.c.h.b16 %v50
    %v141 = vunpack.c.l.b16 %v51
    %v142 = vunpack.c.l.b16 %v52
    %v143 = vunpack.c.h.b16 %v52
    %v144 = vunpack.c.l.b16 %v53
    %v145 = vunpack.c.l.b16 %v54
    %v146 = vunpack.c.h.b16 %v54
    %v147 = vunpack.c.l.b16 %v55
    %v148 = vunpack.c.l.b16 %v56
    %v149 = vunpack.c.h.b16 %v56
    %v150 = vunpack.c.l.b16 %v57
    %v151 = vunpack.c.l.b16 %v58
    %v152 = vunpack.c.h.b16 %v58
    %v153 = vunpack.c.l.b16 %v59
    %v154 = vunpack.c.l.b16 %v60
    %v155 = vunpack.c.h.b16 %v60
    %v156 = vunpack.c.l.b16 %v61
    %v157 = vunpack.c.l.b16 %v62
    %v158 = vunpack.c.h.b16 %v62
    %v159 = vunpack.c.l.b16 %v63
    %v160 = vunpack.c.l.b16 %v64
    %v161 = vunpack.c.h.b16 %v64
    %v162 = vunpack.c.l.b16 %v65
    %v163 = vunpack.c.l.b16 %v66
    %v164 = vunpack.c.h.b16 %v66
    %v165 = vunpack.c.l.b16 %v67
    %v166 = vunpack.c.l.b16 %v68
    %v167 = vunpack.c.h.b16 %v68
    %v168 = vunpack.c.l.b16 %v69
    %v169 = vunpack.c.l.b16 %v70
    %v170 = vunpack.c.h.b16 %v70
    %v171 = vunpack.c.l.b16 %v71
    %v172 = vunpack.c.l.b16 %v72
    %v173 = vunpack.c.h.b16 %v72
    %v174 = vunpack.c.l.b16 %v73
    %v175 = vunpack.c.l.b16 %v74
    %v176 = vunpack.c.h.b16 %v74
    %v177 = vunpack.c.l.b16 %v75
    %v178 = vunpack.c.l.b16 %v76
    %v179 = vunpack.c.h.b16 %v76
    %v180 = vunpack.c.l.b16 %v77
    %v181 = vpack.c.b16 %v136, %v133
    %v182 = vpack.c.b16 %v137, %v134
    %v183 = vpack.c.b16 %v138, %v135
    %v184 = vpack.c.b16 %v142, %v139
    %v185 = vpack.c.b16 %v143, %v140
    %v186 = vpack.c.b16 %v144, %v141
    %v187 = vpack.c.b16 %v148, %v145
    %v188 = vpack.c.b16 %v149, %v146
    %v189 = vpack.c.b16 %v150, %v147
    %v190 = vpack.c.b16 %v154, %v151
    %v191 = vpack.c.b16 %v155, %v152
    %v192 = vpack.c.b16 %v156, %v153
    %v193 = vpack.c.b16 %v160, %v157
    %v194 = vpack.c.b16 %v161, %v158
    %v195 = vpack.c.b16 %v162, %v159
    %v196 = vpack.c.b16 %v166, %v163
    %v197 = vpack.c.b16 %v167, %v164
    %v198 = vpack.c.b16 %v168, %v165
    %v199 = vpack.c.b16 %v172, %v169
    %v200 = vpack.c.b16 %v173, %v170
    %v201 = vpack.c.b16 %v174, %v171
    %v202 = vpack.c.b16 %v178, %v175
    %v203 = vpack.c.b16 %v179, %v176
    %v204 = vpack.c.b16 %v180, %v177
    %229 = vmatprep.subr.bf16.mxu0 %v182
    %230 = vmatpush1.bf16.msra.mxu0 %v181
    %231 = vmatprep.subr.bf16.mxu0 %v185
    %232 = vmatpush1.bf16.msra.mxu0 %v184
    %233 = vmatprep.subr.bf16.mxu0 %v188
    %234 = vmatpush1.bf16.msra.mxu0 %v187
    %235 = vmatprep.subr.bf16.mxu0 %v191
    %236 = vmatpush1.bf16.msra.mxu0 %v190
    %237 = vmatprep.subr.bf16.mxu0 %v194
    %238 = vmatpush1.bf16.msra.mxu0 %v193
    %239 = vmatprep.subr.bf16.mxu0 %v197
    %240 = vmatpush1.bf16.msra.mxu0 %v196
    %241 = vmatprep.subr.bf16.mxu0 %v200
    %242 = vmatpush1.bf16.msra.mxu0 %v199
    %243 = vmatprep.subr.bf16.mxu0 %v203
    %244 = vmatpush1.bf16.msra.mxu0 %v202
    %245 = vmatprep.subr.bf16.mxu0 0
    %246 = vmatpush1.bf16.msra.mxu0 0
    %247 = vmatprep.subr.bf16.mxu0 0
    %248 = vmatpush1.bf16.msra.mxu0 0
    %249 = vmatprep.subr.bf16.mxu0 0
    %250 = vmatpush1.bf16.msra.mxu0 0
    %251 = vmatprep.subr.bf16.mxu0 0
    %252 = vmatpush1.bf16.msra.mxu0 0
    %253 = vmatprep.subr.bf16.mxu0 0
    %254 = vmatpush1.bf16.msra.mxu0 0
    %255 = vmatprep.subr.bf16.mxu0 0
    %256 = vmatpush1.bf16.msra.mxu0 0
    %257 = vmatprep.subr.bf16.mxu0 0
    %258 = vmatpush1.bf16.msra.mxu0 0
    %259 = vmatprep.subr.bf16.mxu0 0
    %260 = vmatpush1.bf16.msra.mxu0 0
    %261 = vmatprep.mubr.bf16.mxu0 0
    %262 = vmatmul.mubr.bf16.gmra.mrb[0].mxu0 %v99
    %v263 = vpop.f32.mrb[0].mxu0
    %v264 = vadd.f32 %v83, %v263
    %v265 = vpop.f32.mrb[0].mxu0
    %v266 = vadd.f32 %v87, %v265
    %v267 = vpop.f32.mrb[0].mxu0
    %v268 = vadd.f32 %v83, %v267
    %v269 = vpop.f32.mrb[0].mxu0
    %v270 = vadd.f32 %v87, %v269
    %271 = vdwg.mxu0
    %272 = vmatprep.subr.bf16.mxu0 0
    %273 = vmatpush1.bf16.msra.mxu0 %v183
    %274 = vmatprep.subr.bf16.mxu0 0
    %275 = vmatpush1.bf16.msra.mxu0 %v186
    %276 = vmatprep.subr.bf16.mxu0 0
    %277 = vmatpush1.bf16.msra.mxu0 %v189
    %278 = vmatprep.subr.bf16.mxu0 0
    %279 = vmatpush1.bf16.msra.mxu0 %v192
    %280 = vmatprep.subr.bf16.mxu0 0
    %281 = vmatpush1.bf16.msra.mxu0 %v195
    %282 = vmatprep.subr.bf16.mxu0 0
    %283 = vmatpush1.bf16.msra.mxu0 %v198
    %284 = vmatprep.subr.bf16.mxu0 0
    %285 = vmatpush1.bf16.msra.mxu0 %v201
    %286 = vmatprep.subr.bf16.mxu0 0
    %287 = vmatpush1.bf16.msra.mxu0 %v204
    %288 = vmatprep.subr.bf16.mxu0 0
    %289 = vmatpush1.bf16.msra.mxu0 0
    %290 = vmatprep.subr.bf16.mxu0 0
    %291 = vmatpush1.bf16.msra.mxu0 0
    %292 = vmatprep.subr.bf16.mxu0 0
    %293 = vmatpush1.bf16.msra.mxu0 0
    %294 = vmatprep.subr.bf16.mxu0 0
    %295 = vmatpush1.bf16.msra.mxu0 0
    %296 = vmatprep.subr.bf16.mxu0 0
    %297 = vmatpush1.bf16.msra.mxu0 0
    %298 = vmatprep.subr.bf16.mxu0 0
    %299 = vmatpush1.bf16.msra.mxu0 0
    %300 = vmatprep.subr.bf16.mxu0 0
    %301 = vmatpush1.bf16.msra.mxu0 0
    %302 = vmatprep.subr.bf16.mxu0 0
    %303 = vmatpush1.bf16.msra.mxu0 0
    %304 = vmatprep.mubr.bf16.mxu0 0
    %305 = vmatmul.mubr.bf16.gmra.mrb[0].mxu0 %v99
    %v306 = vpop.f32.mrb[0].mxu0
    %v307 = vadd.f32 %v91, %v306
    %v308 = vpop.f32.mrb[0].mxu0
    %v309 = vpop.f32.mrb[0].mxu0
    %v310 = vadd.f32 %v91, %v309
    %v311 = vpop.f32.mrb[0].mxu0
    %312 = vdwg.mxu0
    %313 = vst [vmem:[#allocation7] sm:$0xff] %v264
    %314 = vst [vmem:[#allocation7 + $0x8] sm:$0xff] %v266
    %315 = vst [vmem:[#allocation7 + $0x10] sm:$0xff] %v307
    %316 = vst [vmem:[#allocation7 + $0x18] sm:$0xff] %v268
    %317 = vst [vmem:[#allocation7 + $0x20] sm:$0xff] %v270
    %318 = vst [vmem:[#allocation7 + $0x28] sm:$0xff] %v310
    // Predicated region
    $region22: #{tpu_custom_call.1} parent=1 // pred_check
      _
    $region23: #{tpu_custom_call.1} parent=1 // pred_check_branch
      %320 = sbr.rel (0) target = $region25
    $region24: #{tpu_custom_call.1} parent=1 // pred_region
      %s322 = ssub.s32 768, 768
      %323 = vsyncadd [#allocation4], %s322
      %s324 = sshll.u32 [#allocation7], 4
      %s325 = int_to_ptr.vmem [resolvable:$true] %s324
      %330 = dma.vmem_to_hbm [thread:$0]  %s325, 768, %s3, [#allocation4], 384, 384, 24
    $region25: #{tpu_custom_call.1} parent=1 // pred_fallthru
      _
    // Predicated region
    $region26: #{tpu_custom_call.1} parent=1 // pred_check
      _
    $region27: #{tpu_custom_call.1} parent=1 // pred_check_branch
      %332 = sbr.rel (0) target = $region29
    $region28: #{tpu_custom_call.1} parent=1 // pred_region
      %333 = dma.done [#allocation4], 768
    $region29: #{tpu_custom_call.1} parent=1 // pred_fallthru
      _
    %334 = vsyncpa [#allocation3], 1
    %335 = vsyncpa [#allocation6], 1
    %336 = vsyncpa [#allocation4], 1

</llo_original>
